<compile_context>
chip_gen: v7x
topology: tpu7x:2x2x1
jax: 0.10.0
libtpu: 0.0.40
codegen_flags: <defaults>
</compile_context>

<pallas_src>
import functools

import jax
import jax.numpy as jnp
from jax.experimental import pallas as pl
from jax.experimental.pallas import tpu as pltpu


# ----------------------------------------------------------------------------- kernel
def lstm_head_kernel(xg_ref, whh_ref, wout_ref, bout_ref, out_ref):
    """LSTM recurrence over precomputed input gates + output head.

    xg_ref  : (B, T, 4H) f32  precomputed input-gate contributions (proj/ih/biases folded in,
                              cell-gate columns pre-scaled by 2 for the sigmoid/tanh identity)
    whh_ref : (H, 4H)    f32  transposed LSTM weight_hh_l0 (cell-gate columns pre-scaled by 2)
    wout_ref: (H, P)     f32  transposed nn.Linear weight, lane-padded to P (multiple of 128)
    bout_ref: (1, P)     f32  lane-padded bias
    out_ref : (B, P)     f32  lane-padded output
    """
    B = xg_ref.shape[0]
    T = xg_ref.shape[1]
    H = whh_ref.shape[0]

    whh = whh_ref[...]                                 # hoisted: loaded once, reused all T steps

    h = jnp.zeros((B, H), jnp.float32)
    c = jnp.zeros((B, H), jnp.float32)

    # T is static and small -> unrolled recurrence (static slicing, LLO-visible).
    for t in range(T):
        # Per-step static slice of xg keeps live vreg pressure at one timestep's worth.
        g = xg_ref[:, t, :] + jnp.dot(h, whh, preferred_element_type=jnp.float32)  # (B, 4H)
        # One full-width sigmoid over all 128 gate lanes (1 EUP op); cell gate recovered via
        # tanh(x) = 2*sigmoid(2x) - 1 (the 2x was folded into the weights offline).
        s = jax.nn.sigmoid(g)
        # PyTorch LSTM gate order: i, f, g, o
        i_g = s[:, 0 * H:1 * H]
        f_g = s[:, 1 * H:2 * H]
        g_g = 2.0 * s[:, 2 * H:3 * H] - 1.0
        o_g = s[:, 3 * H:4 * H]
        # TODO(synk): the three lane extractions above sit on the serial path; a per-gate-split
        # whh layout would remove them at the cost of 4 MXU pushes / step — decide from a bundle
        # dump before switching.
        c = f_g * c + i_g * g_g
        h = o_g * jnp.tanh(c)                          # 2nd (and last) EUP op per step

    # Output head on the last hidden state (lane-dense padded store).
    # TODO(synk): on v6e/v7x consider bf16 h/whh for the recurrent dot (keep f32 accumulation);
    # skipped here to preserve the 1e-4 tolerance against the f32 reference.
    out_ref[...] = (jnp.dot(h, wout_ref[...], preferred_element_type=jnp.float32)
                    + bout_ref[...]).astype(out_ref.dtype)


# ----------------------------------------------------------------------------- params
def make_params(key, d_acts, d_embedding=32, d_hidden=32):
    # Mirrors the PyTorch module; LSTM only runs when d_embedding == d_hidden (see note above).
    assert d_embedding == d_hidden, "Modelo_ind requires d_embedding == d_hidden at runtime"
    ks = jax.random.split(key, 10)
    u = lambda k, shape, scale: jax.random.uniform(k, shape, jnp.float32, -scale, scale)

    # Embedding (padding_idx=0 -> row 0 zeroed, matching PyTorch init semantics).
    emb_w = jax.random.normal(ks[0], (d_acts, d_embedding), jnp.float32)
    emb_w = emb_w.at[0].set(0.0)

    d_in = d_embedding + 2
    sp = 1.0 / jnp.sqrt(d_in)
    wproj_t = u(ks[1], (d_in, d_hidden), sp)              # transposed (in, out)
    bproj = u(ks[2], (1, d_hidden), sp)

    sh = 1.0 / jnp.sqrt(d_hidden)
    wih_t = u(ks[3], (d_hidden, 4 * d_hidden), sh)        # transposed LSTM weight_ih_l0
    bih = u(ks[4], (1, 4 * d_hidden), sh)
    whh_t = u(ks[5], (d_hidden, 4 * d_hidden), sh)        # transposed LSTM weight_hh_l0
    bhh = u(ks[6], (1, 4 * d_hidden), sh)

    wout_t = u(ks[7], (d_hidden, d_acts + 1), sh)         # transposed nn.Linear weight
    bout = u(ks[8], (1, d_acts + 1), sh)

    return dict(emb_w=emb_w, wproj_t=wproj_t, bproj=bproj, wih_t=wih_t, bih=bih,
                whh_t=whh_t, bhh=bhh, wout_t=wout_t, bout=bout)


def fuse_params(params):
    """Exact algebraic fold of embedding/concat/linear_proj/LSTM-input path into a gather table.

    Called ONCE per parameter set (hoisted out of the forward). Also pre-scales the cell-gate
    columns by 2 so the kernel can use the tanh(x) = 2*sigmoid(2x) - 1 identity.
    Returns (fused_arrays_dict, n_out).
    """
    emb_w = params["emb_w"]
    d_acts, d_embedding = emb_w.shape
    d_hidden = params["whh_t"].shape[0]
    h4 = 4 * d_hidden

    # Fold linear_proj into the LSTM input-gate weights (both affine, no nonlinearity between).
    W_x = params["wproj_t"] @ params["wih_t"]                                  # (Din, 4H)
    b_x = params["bproj"] @ params["wih_t"] + params["bih"] + params["bhh"]    # (1, 4H)

    # Pre-scale cell-gate (g) columns [2H:3H] by 2 (input side AND recurrent side) so the kernel
    # needs only one full-width sigmoid + one tanh per step.
    scale = jnp.ones((h4,), jnp.float32).at[2 * d_hidden:3 * d_hidden].set(2.0)
    W_x = W_x * scale
    b_x = b_x * scale
    whh_t = params["whh_t"] * scale

    # Fold the embedding (one-hot @ emb_w) through W_x -> per-activity gate rows.
    gate_table = emb_w @ W_x[:d_embedding]                                     # (d_acts, 4H)
    w_tp = W_x[d_embedding]                                                    # (4H,)
    w_tc = W_x[d_embedding + 1]                                                # (4H,)

    # Pad the output head to a lane-dense width (multiple of 128).
    n_out = d_acts + 1
    out_pad = 128 * pl.cdiv(n_out, 128)
    wout_pad = jnp.zeros((d_hidden, out_pad), jnp.float32).at[:, :n_out].set(params["wout_t"])
    bout_pad = jnp.zeros((1, out_pad), jnp.float32).at[:, :n_out].set(params["bout"])

    fused = dict(gate_table=gate_table, w_tp=w_tp, w_tc=w_tc, b_x=b_x,
                 whh_t=whh_t, wout_pad=wout_pad, bout_pad=bout_pad)
    return fused, n_out


# ----------------------------------------------------------------------------- forward
@functools.partial(jax.jit, static_argnames=("n_out",))
def modelo_ind_forward(x, fused, *, n_out):
    """x: (B, T, 3) float32. fused: output of fuse_params. Returns (B, n_out) float32."""
    B, T, _ = x.shape
    out_pad = fused["wout_pad"].shape[1]

    # --- XLA glue (fused under jit): gather per-activity gate rows + 2 FMAs for time features ---
    idx = x[:, :, 0].astype(jnp.int32)                          # .long()
    xg = (jnp.take(fused["gate_table"], idx, axis=0)            # (B, T, 4H)
          + x[:, :, 1:2] * fused["w_tp"]
          + x[:, :, 2:3] * fused["w_tc"]
          + fused["b_x"][0])
    # TODO(synk): at production batch sizes move this gather + FMA inside the kernel (pass the
    # gate_table + raw ids/times) to avoid the HBM round-trip of the (B,T,4H) xg tensor.

    out_padded = pl.pallas_call(
        lstm_head_kernel,
        out_shape=jax.ShapeDtypeStruct((B, out_pad), jnp.float32),
        in_specs=[pl.BlockSpec(memory_space=pltpu.MemorySpace.VMEM)] * 4,
        out_specs=pl.BlockSpec(memory_space=pltpu.MemorySpace.VMEM),
    )(xg, fused["whh_t"], fused["wout_pad"], fused["bout_pad"])

    # TODO(synk): for production batch sizes add a 1-D batch grid (Btile multiple of 8, >=128)
    # with dimension_semantics=("parallel",) so both v7x TensorCores and the MXU M-dim are used;
    # at B=2 a grid is pure per-step overhead.
    return out_padded[:, :n_out]


# ----------------------------------------------------------------------------- reference
def modelo_ind_reference(x, params):
    """Pure-JAX reference mirroring the un-fused PyTorch forward, for correctness checking."""
    emb_w = params["emb_w"]
    idx = x[:, :, 0].astype(jnp.int32)
    act_emb = jnp.take(emb_w, idx, axis=0)
    emb_cat = jnp.concatenate([act_emb, x[:, :, 1:2], x[:, :, 2:3]], axis=-1)
    xp = emb_cat @ params["wproj_t"] + params["bproj"][0]
    B, T, H = xp.shape[0], xp.shape[1], params["whh_t"].shape[0]
    h = jnp.zeros((B, H), jnp.float32)
    c = jnp.zeros((B, H), jnp.float32)
    for t in range(T):
        g = xp[:, t, :] @ params["wih_t"] + params["bih"][0] \
            + h @ params["whh_t"] + params["bhh"][0]
        i_g = jax.nn.sigmoid(g[:, 0 * H:1 * H])
        f_g = jax.nn.sigmoid(g[:, 1 * H:2 * H])
        g_g = jnp.tanh(g[:, 2 * H:3 * H])
        o_g = jax.nn.sigmoid(g[:, 3 * H:4 * H])
        c = f_g * c + i_g * g_g
        h = o_g * jnp.tanh(c)
    return h @ params["wout_t"] + params["bout"][0]


if __name__ == "__main__":
    key = jax.random.PRNGKey(0)
    k_param, k_idx, k_time = jax.random.split(key, 3)

    B, T = 2, 8
    d_acts, d_embedding, d_hidden = 10, 32, 32

    params = make_params(k_param, d_acts, d_embedding, d_hidden)
    fused, n_out = fuse_params(params)            # hoisted: computed once, reused every call

    # x[:, :, 0] = integer activity ids, x[:, :, 1:3] = float time features.
    act_ids = jax.random.randint(k_idx, (B, T, 1), 0, d_acts).astype(jnp.float32)
    times = jax.random.uniform(k_time, (B, T, 2), jnp.float32)
    x = jnp.concatenate([act_ids, times], axis=-1)        # (B, T, 3)

    out = modelo_ind_forward(x, fused, n_out=n_out)
    out = jax.block_until_ready(out)

    ref = modelo_ind_reference(x, params)
    assert out.shape == (B, d_acts + 1)
    assert jnp.allclose(out, ref, atol=1e-4, rtol=1e-4)

    print("KERNEL_OK")
</pallas_src>

<mosaic_0001>
module attributes {stable_mosaic.version = 11 : i64} {
  func.func @lstm_head_kernel(%arg0: memref<2x8x128xf32, #tpu.memory_space<vmem>>, %arg1: memref<32x128xf32, #tpu.memory_space<vmem>>, %arg2: memref<32x128xf32, #tpu.memory_space<vmem>>, %arg3: memref<1x128xf32, #tpu.memory_space<vmem>>, %arg4: memref<2x128xf32, #tpu.memory_space<vmem>>) attributes {dimension_semantics = [], scalar_prefetch = 0 : i64, scratch_operands = 0 : i64, tpu.core_type = #tpu.core_type<tc>} {
    %c0 = arith.constant 0 : index
    %c0_0 = arith.constant 0 : index
    %0 = vector.load %arg1[%c0, %c0_0] : memref<32x128xf32, #tpu.memory_space<vmem>>, vector<32x128xf32>
    %cst = arith.constant 0.000000e+00 : f32
    %1 = vector.broadcast %cst : f32 to vector<2x32xf32>
    %cst_1 = arith.constant 0.000000e+00 : f32
    %2 = vector.broadcast %cst_1 : f32 to vector<2x32xf32>
    %c0_2 = arith.constant 0 : index
    %c0_3 = arith.constant 0 : index
    %c0_4 = arith.constant 0 : index
    %3 = vector.load %arg0[%c0_2, %c0_3, %c0_4] : memref<2x8x128xf32, #tpu.memory_space<vmem>>, vector<2x1x128xf32>
    %4 = vector.shape_cast %3 : vector<2x1x128xf32> to vector<2x128xf32>
    %cst_5 = arith.constant dense<0.000000e+00> : vector<2x128xf32>
    %5 = tpu.matmul %1, %0, %cst_5 {dimension_numbers = #tpu.dot_dimension_numbers<[1], [0], [0], [1], [0, 0, 1, 1], [], []>} : vector<2x32xf32>, vector<32x128xf32>, vector<2x128xf32> -> vector<2x128xf32>
    %6 = arith.addf %4, %5 : vector<2x128xf32>
    %7 = arith.negf %6 : vector<2x128xf32>
    %8 = math.exp %7 : vector<2x128xf32>
    %cst_6 = arith.constant 1.000000e+00 : f32
    %9 = vector.broadcast %cst_6 : f32 to vector<2x128xf32>
    %10 = arith.addf %9, %8 : vector<2x128xf32>
    %11 = arith.divf %9, %10 : vector<2x128xf32>
    %12 = vector.extract_strided_slice %11 {offsets = [0, 0], sizes = [2, 32], strides = [1, 1]} : vector<2x128xf32> to vector<2x32xf32>
    %13 = vector.extract_strided_slice %11 {offsets = [0, 32], sizes = [2, 32], strides = [1, 1]} : vector<2x128xf32> to vector<2x32xf32>
    %14 = vector.extract_strided_slice %11 {offsets = [0, 64], sizes = [2, 32], strides = [1, 1]} : vector<2x128xf32> to vector<2x32xf32>
    %cst_7 = arith.constant 2.000000e+00 : f32
    %15 = vector.broadcast %cst_7 : f32 to vector<2x32xf32>
    %16 = arith.mulf %15, %14 : vector<2x32xf32>
    %cst_8 = arith.constant 1.000000e+00 : f32
    %17 = vector.broadcast %cst_8 : f32 to vector<2x32xf32>
    %18 = arith.subf %16, %17 : vector<2x32xf32>
    %19 = vector.extract_strided_slice %11 {offsets = [0, 96], sizes = [2, 32], strides = [1, 1]} : vector<2x128xf32> to vector<2x32xf32>
    %20 = arith.mulf %13, %2 : vector<2x32xf32>
    %21 = arith.mulf %12, %18 : vector<2x32xf32>
    %22 = arith.addf %20, %21 : vector<2x32xf32>
    %23 = math.tanh %22 : vector<2x32xf32>
    %24 = arith.mulf %19, %23 : vector<2x32xf32>
    %c0_9 = arith.constant 0 : index
    %c1 = arith.constant 1 : index
    %c0_10 = arith.constant 0 : index
    %25 = vector.load %arg0[%c0_9, %c1, %c0_10] : memref<2x8x128xf32, #tpu.memory_space<vmem>>, vector<2x1x128xf32>
    %26 = vector.shape_cast %25 : vector<2x1x128xf32> to vector<2x128xf32>
    %cst_11 = arith.constant dense<0.000000e+00> : vector<2x128xf32>
    %27 = tpu.matmul %24, %0, %cst_11 {dimension_numbers = #tpu.dot_dimension_numbers<[1], [0], [0], [1], [0, 0, 1, 1], [], []>} : vector<2x32xf32>, vector<32x128xf32>, vector<2x128xf32> -> vector<2x128xf32>
    %28 = arith.addf %26, %27 : vector<2x128xf32>
    %29 = arith.negf %28 : vector<2x128xf32>
    %30 = math.exp %29 : vector<2x128xf32>
    %cst_12 = arith.constant 1.000000e+00 : f32
    %31 = vector.broadcast %cst_12 : f32 to vector<2x128xf32>
    %32 = arith.addf %31, %30 : vector<2x128xf32>
    %33 = arith.divf %31, %32 : vector<2x128xf32>
    %34 = vector.extract_strided_slice %33 {offsets = [0, 0], sizes = [2, 32], strides = [1, 1]} : vector<2x128xf32> to vector<2x32xf32>
    %35 = vector.extract_strided_slice %33 {offsets = [0, 32], sizes = [2, 32], strides = [1, 1]} : vector<2x128xf32> to vector<2x32xf32>
    %36 = vector.extract_strided_slice %33 {offsets = [0, 64], sizes = [2, 32], strides = [1, 1]} : vector<2x128xf32> to vector<2x32xf32>
    %cst_13 = arith.constant 2.000000e+00 : f32
    %37 = vector.broadcast %cst_13 : f32 to vector<2x32xf32>
    %38 = arith.mulf %37, %36 : vector<2x32xf32>
    %cst_14 = arith.constant 1.000000e+00 : f32
    %39 = vector.broadcast %cst_14 : f32 to vector<2x32xf32>
    %40 = arith.subf %38, %39 : vector<2x32xf32>
    %41 = vector.extract_strided_slice %33 {offsets = [0, 96], sizes = [2, 32], strides = [1, 1]} : vector<2x128xf32> to vector<2x32xf32>
    %42 = arith.mulf %35, %22 : vector<2x32xf32>
    %43 = arith.mulf %34, %40 : vector<2x32xf32>
    %44 = arith.addf %42, %43 : vector<2x32xf32>
    %45 = math.tanh %44 : vector<2x32xf32>
    %46 = arith.mulf %41, %45 : vector<2x32xf32>
    %c0_15 = arith.constant 0 : index
    %c2 = arith.constant 2 : index
    %c0_16 = arith.constant 0 : index
    %47 = vector.load %arg0[%c0_15, %c2, %c0_16] : memref<2x8x128xf32, #tpu.memory_space<vmem>>, vector<2x1x128xf32>
    %48 = vector.shape_cast %47 : vector<2x1x128xf32> to vector<2x128xf32>
    %cst_17 = arith.constant dense<0.000000e+00> : vector<2x128xf32>
    %49 = tpu.matmul %46, %0, %cst_17 {dimension_numbers = #tpu.dot_dimension_numbers<[1], [0], [0], [1], [0, 0, 1, 1], [], []>} : vector<2x32xf32>, vector<32x128xf32>, vector<2x128xf32> -> vector<2x128xf32>
    %50 = arith.addf %48, %49 : vector<2x128xf32>
    %51 = arith.negf %50 : vector<2x128xf32>
    %52 = math.exp %51 : vector<2x128xf32>
    %cst_18 = arith.constant 1.000000e+00 : f32
    %53 = vector.broadcast %cst_18 : f32 to vector<2x128xf32>
    %54 = arith.addf %53, %52 : vector<2x128xf32>
    %55 = arith.divf %53, %54 : vector<2x128xf32>
    %56 = vector.extract_strided_slice %55 {offsets = [0, 0], sizes = [2, 32], strides = [1, 1]} : vector<2x128xf32> to vector<2x32xf32>
    %57 = vector.extract_strided_slice %55 {offsets = [0, 32], sizes = [2, 32], strides = [1, 1]} : vector<2x128xf32> to vector<2x32xf32>
    %58 = vector.extract_strided_slice %55 {offsets = [0, 64], sizes = [2, 32], strides = [1, 1]} : vector<2x128xf32> to vector<2x32xf32>
    %cst_19 = arith.constant 2.000000e+00 : f32
    %59 = vector.broadcast %cst_19 : f32 to vector<2x32xf32>
    %60 = arith.mulf %59, %58 : vector<2x32xf32>
    %cst_20 = arith.constant 1.000000e+00 : f32
    %61 = vector.broadcast %cst_20 : f32 to vector<2x32xf32>
    %62 = arith.subf %60, %61 : vector<2x32xf32>
    %63 = vector.extract_strided_slice %55 {offsets = [0, 96], sizes = [2, 32], strides = [1, 1]} : vector<2x128xf32> to vector<2x32xf32>
    %64 = arith.mulf %57, %44 : vector<2x32xf32>
    %65 = arith.mulf %56, %62 : vector<2x32xf32>
    %66 = arith.addf %64, %65 : vector<2x32xf32>
    %67 = math.tanh %66 : vector<2x32xf32>
    %68 = arith.mulf %63, %67 : vector<2x32xf32>
    %c0_21 = arith.constant 0 : index
    %c3 = arith.constant 3 : index
    %c0_22 = arith.constant 0 : index
    %69 = vector.load %arg0[%c0_21, %c3, %c0_22] : memref<2x8x128xf32, #tpu.memory_space<vmem>>, vector<2x1x128xf32>
    %70 = vector.shape_cast %69 : vector<2x1x128xf32> to vector<2x128xf32>
    %cst_23 = arith.constant dense<0.000000e+00> : vector<2x128xf32>
    %71 = tpu.matmul %68, %0, %cst_23 {dimension_numbers = #tpu.dot_dimension_numbers<[1], [0], [0], [1], [0, 0, 1, 1], [], []>} : vector<2x32xf32>, vector<32x128xf32>, vector<2x128xf32> -> vector<2x128xf32>
    %72 = arith.addf %70, %71 : vector<2x128xf32>
    %73 = arith.negf %72 : vector<2x128xf32>
    %74 = math.exp %73 : vector<2x128xf32>
    %cst_24 = arith.constant 1.000000e+00 : f32
    %75 = vector.broadcast %cst_24 : f32 to vector<2x128xf32>
    %76 = arith.addf %75, %74 : vector<2x128xf32>
    %77 = arith.divf %75, %76 : vector<2x128xf32>
    %78 = vector.extract_strided_slice %77 {offsets = [0, 0], sizes = [2, 32], strides = [1, 1]} : vector<2x128xf32> to vector<2x32xf32>
    %79 = vector.extract_strided_slice %77 {offsets = [0, 32], sizes = [2, 32], strides = [1, 1]} : vector<2x128xf32> to vector<2x32xf32>
    %80 = vector.extract_strided_slice %77 {offsets = [0, 64], sizes = [2, 32], strides = [1, 1]} : vector<2x128xf32> to vector<2x32xf32>
    %cst_25 = arith.constant 2.000000e+00 : f32
    %81 = vector.broadcast %cst_25 : f32 to vector<2x32xf32>
    %82 = arith.mulf %81, %80 : vector<2x32xf32>
    %cst_26 = arith.constant 1.000000e+00 : f32
    %83 = vector.broadcast %cst_26 : f32 to vector<2x32xf32>
    %84 = arith.subf %82, %83 : vector<2x32xf32>
    %85 = vector.extract_strided_slice %77 {offsets = [0, 96], sizes = [2, 32], strides = [1, 1]} : vector<2x128xf32> to vector<2x32xf32>
    %86 = arith.mulf %79, %66 : vector<2x32xf32>
    %87 = arith.mulf %78, %84 : vector<2x32xf32>
    %88 = arith.addf %86, %87 : vector<2x32xf32>
    %89 = math.tanh %88 : vector<2x32xf32>
    %90 = arith.mulf %85, %89 : vector<2x32xf32>
    %c0_27 = arith.constant 0 : index
    %c4 = arith.constant 4 : index
    %c0_28 = arith.constant 0 : index
    %91 = vector.load %arg0[%c0_27, %c4, %c0_28] : memref<2x8x128xf32, #tpu.memory_space<vmem>>, vector<2x1x128xf32>
    %92 = vector.shape_cast %91 : vector<2x1x128xf32> to vector<2x128xf32>
    %cst_29 = arith.constant dense<0.000000e+00> : vector<2x128xf32>
    %93 = tpu.matmul %90, %0, %cst_29 {dimension_numbers = #tpu.dot_dimension_numbers<[1], [0], [0], [1], [0, 0, 1, 1], [], []>} : vector<2x32xf32>, vector<32x128xf32>, vector<2x128xf32> -> vector<2x128xf32>
    %94 = arith.addf %92, %93 : vector<2x128xf32>
    %95 = arith.negf %94 : vector<2x128xf32>
    %96 = math.exp %95 : vector<2x128xf32>
    %cst_30 = arith.constant 1.000000e+00 : f32
    %97 = vector.broadcast %cst_30 : f32 to vector<2x128xf32>
    %98 = arith.addf %97, %96 : vector<2x128xf32>
    %99 = arith.divf %97, %98 : vector<2x128xf32>
    %100 = vector.extract_strided_slice %99 {offsets = [0, 0], sizes = [2, 32], strides = [1, 1]} : vector<2x128xf32> to vector<2x32xf32>
    %101 = vector.extract_strided_slice %99 {offsets = [0, 32], sizes = [2, 32], strides = [1, 1]} : vector<2x128xf32> to vector<2x32xf32>
    %102 = vector.extract_strided_slice %99 {offsets = [0, 64], sizes = [2, 32], strides = [1, 1]} : vector<2x128xf32> to vector<2x32xf32>
    %cst_31 = arith.constant 2.000000e+00 : f32
    %103 = vector.broadcast %cst_31 : f32 to vector<2x32xf32>
    %104 = arith.mulf %103, %102 : vector<2x32xf32>
    %cst_32 = arith.constant 1.000000e+00 : f32
    %105 = vector.broadcast %cst_32 : f32 to vector<2x32xf32>
    %106 = arith.subf %104, %105 : vector<2x32xf32>
    %107 = vector.extract_strided_slice %99 {offsets = [0, 96], sizes = [2, 32], strides = [1, 1]} : vector<2x128xf32> to vector<2x32xf32>
    %108 = arith.mulf %101, %88 : vector<2x32xf32>
    %109 = arith.mulf %100, %106 : vector<2x32xf32>
    %110 = arith.addf %108, %109 : vector<2x32xf32>
    %111 = math.tanh %110 : vector<2x32xf32>
    %112 = arith.mulf %107, %111 : vector<2x32xf32>
    %c0_33 = arith.constant 0 : index
    %c5 = arith.constant 5 : index
    %c0_34 = arith.constant 0 : index
    %113 = vector.load %arg0[%c0_33, %c5, %c0_34] : memref<2x8x128xf32, #tpu.memory_space<vmem>>, vector<2x1x128xf32>
    %114 = vector.shape_cast %113 : vector<2x1x128xf32> to vector<2x128xf32>
    %cst_35 = arith.constant dense<0.000000e+00> : vector<2x128xf32>
    %115 = tpu.matmul %112, %0, %cst_35 {dimension_numbers = #tpu.dot_dimension_numbers<[1], [0], [0], [1], [0, 0, 1, 1], [], []>} : vector<2x32xf32>, vector<32x128xf32>, vector<2x128xf32> -> vector<2x128xf32>
    %116 = arith.addf %114, %115 : vector<2x128xf32>
    %117 = arith.negf %116 : vector<2x128xf32>
    %118 = math.exp %117 : vector<2x128xf32>
    %cst_36 = arith.constant 1.000000e+00 : f32
    %119 = vector.broadcast %cst_36 : f32 to vector<2x128xf32>
    %120 = arith.addf %119, %118 : vector<2x128xf32>
    %121 = arith.divf %119, %120 : vector<2x128xf32>
    %122 = vector.extract_strided_slice %121 {offsets = [0, 0], sizes = [2, 32], strides = [1, 1]} : vector<2x128xf32> to vector<2x32xf32>
    %123 = vector.extract_strided_slice %121 {offsets = [0, 32], sizes = [2, 32], strides = [1, 1]} : vector<2x128xf32> to vector<2x32xf32>
    %124 = vector.extract_strided_slice %121 {offsets = [0, 64], sizes = [2, 32], strides = [1, 1]} : vector<2x128xf32> to vector<2x32xf32>
    %cst_37 = arith.constant 2.000000e+00 : f32
    %125 = vector.broadcast %cst_37 : f32 to vector<2x32xf32>
    %126 = arith.mulf %125, %124 : vector<2x32xf32>
    %cst_38 = arith.constant 1.000000e+00 : f32
    %127 = vector.broadcast %cst_38 : f32 to vector<2x32xf32>
    %128 = arith.subf %126, %127 : vector<2x32xf32>
    %129 = vector.extract_strided_slice %121 {offsets = [0, 96], sizes = [2, 32], strides = [1, 1]} : vector<2x128xf32> to vector<2x32xf32>
    %130 = arith.mulf %123, %110 : vector<2x32xf32>
    %131 = arith.mulf %122, %128 : vector<2x32xf32>
    %132 = arith.addf %130, %131 : vector<2x32xf32>
    %133 = math.tanh %132 : vector<2x32xf32>
    %134 = arith.mulf %129, %133 : vector<2x32xf32>
    %c0_39 = arith.constant 0 : index
    %c6 = arith.constant 6 : index
    %c0_40 = arith.constant 0 : index
    %135 = vector.load %arg0[%c0_39, %c6, %c0_40] : memref<2x8x128xf32, #tpu.memory_space<vmem>>, vector<2x1x128xf32>
    %136 = vector.shape_cast %135 : vector<2x1x128xf32> to vector<2x128xf32>
    %cst_41 = arith.constant dense<0.000000e+00> : vector<2x128xf32>
    %137 = tpu.matmul %134, %0, %cst_41 {dimension_numbers = #tpu.dot_dimension_numbers<[1], [0], [0], [1], [0, 0, 1, 1], [], []>} : vector<2x32xf32>, vector<32x128xf32>, vector<2x128xf32> -> vector<2x128xf32>
    %138 = arith.addf %136, %137 : vector<2x128xf32>
    %139 = arith.negf %138 : vector<2x128xf32>
    %140 = math.exp %139 : vector<2x128xf32>
    %cst_42 = arith.constant 1.000000e+00 : f32
    %141 = vector.broadcast %cst_42 : f32 to vector<2x128xf32>
    %142 = arith.addf %141, %140 : vector<2x128xf32>
    %143 = arith.divf %141, %142 : vector<2x128xf32>
    %144 = vector.extract_strided_slice %143 {offsets = [0, 0], sizes = [2, 32], strides = [1, 1]} : vector<2x128xf32> to vector<2x32xf32>
    %145 = vector.extract_strided_slice %143 {offsets = [0, 32], sizes = [2, 32], strides = [1, 1]} : vector<2x128xf32> to vector<2x32xf32>
    %146 = vector.extract_strided_slice %143 {offsets = [0, 64], sizes = [2, 32], strides = [1, 1]} : vector<2x128xf32> to vector<2x32xf32>
    %cst_43 = arith.constant 2.000000e+00 : f32
    %147 = vector.broadcast %cst_43 : f32 to vector<2x32xf32>
    %148 = arith.mulf %147, %146 : vector<2x32xf32>
    %cst_44 = arith.constant 1.000000e+00 : f32
    %149 = vector.broadcast %cst_44 : f32 to vector<2x32xf32>
    %150 = arith.subf %148, %149 : vector<2x32xf32>
    %151 = vector.extract_strided_slice %143 {offsets = [0, 96], sizes = [2, 32], strides = [1, 1]} : vector<2x128xf32> to vector<2x32xf32>
    %152 = arith.mulf %145, %132 : vector<2x32xf32>
    %153 = arith.mulf %144, %150 : vector<2x32xf32>
    %154 = arith.addf %152, %153 : vector<2x32xf32>
    %155 = math.tanh %154 : vector<2x32xf32>
    %156 = arith.mulf %151, %155 : vector<2x32xf32>
    %c0_45 = arith.constant 0 : index
    %c7 = arith.constant 7 : index
    %c0_46 = arith.constant 0 : index
    %157 = vector.load %arg0[%c0_45, %c7, %c0_46] : memref<2x8x128xf32, #tpu.memory_space<vmem>>, vector<2x1x128xf32>
    %158 = vector.shape_cast %157 : vector<2x1x128xf32> to vector<2x128xf32>
    %cst_47 = arith.constant dense<0.000000e+00> : vector<2x128xf32>
    %159 = tpu.matmul %156, %0, %cst_47 {dimension_numbers = #tpu.dot_dimension_numbers<[1], [0], [0], [1], [0, 0, 1, 1], [], []>} : vector<2x32xf32>, vector<32x128xf32>, vector<2x128xf32> -> vector<2x128xf32>
    %160 = arith.addf %158, %159 : vector<2x128xf32>
    %161 = arith.negf %160 : vector<2x128xf32>
    %162 = math.exp %161 : vector<2x128xf32>
    %cst_48 = arith.constant 1.000000e+00 : f32
    %163 = vector.broadcast %cst_48 : f32 to vector<2x128xf32>
    %164 = arith.addf %163, %162 : vector<2x128xf32>
    %165 = arith.divf %163, %164 : vector<2x128xf32>
    %166 = vector.extract_strided_slice %165 {offsets = [0, 0], sizes = [2, 32], strides = [1, 1]} : vector<2x128xf32> to vector<2x32xf32>
    %167 = vector.extract_strided_slice %165 {offsets = [0, 32], sizes = [2, 32], strides = [1, 1]} : vector<2x128xf32> to vector<2x32xf32>
    %168 = vector.extract_strided_slice %165 {offsets = [0, 64], sizes = [2, 32], strides = [1, 1]} : vector<2x128xf32> to vector<2x32xf32>
    %cst_49 = arith.constant 2.000000e+00 : f32
    %169 = vector.broadcast %cst_49 : f32 to vector<2x32xf32>
    %170 = arith.mulf %169, %168 : vector<2x32xf32>
    %cst_50 = arith.constant 1.000000e+00 : f32
    %171 = vector.broadcast %cst_50 : f32 to vector<2x32xf32>
    %172 = arith.subf %170, %171 : vector<2x32xf32>
    %173 = vector.extract_strided_slice %165 {offsets = [0, 96], sizes = [2, 32], strides = [1, 1]} : vector<2x128xf32> to vector<2x32xf32>
    %174 = arith.mulf %167, %154 : vector<2x32xf32>
    %175 = arith.mulf %166, %172 : vector<2x32xf32>
    %176 = arith.addf %174, %175 : vector<2x32xf32>
    %177 = math.tanh %176 : vector<2x32xf32>
    %178 = arith.mulf %173, %177 : vector<2x32xf32>
    %c0_51 = arith.constant 0 : index
    %c0_52 = arith.constant 0 : index
    %179 = vector.load %arg2[%c0_51, %c0_52] : memref<32x128xf32, #tpu.memory_space<vmem>>, vector<32x128xf32>
    %cst_53 = arith.constant dense<0.000000e+00> : vector<2x128xf32>
    %180 = tpu.matmul %178, %179, %cst_53 {dimension_numbers = #tpu.dot_dimension_numbers<[1], [0], [0], [1], [0, 0, 1, 1], [], []>} : vector<2x32xf32>, vector<32x128xf32>, vector<2x128xf32> -> vector<2x128xf32>
    %c0_54 = arith.constant 0 : index
    %c0_55 = arith.constant 0 : index
    %181 = vector.load %arg3[%c0_54, %c0_55] : memref<1x128xf32, #tpu.memory_space<vmem>>, vector<1x128xf32>
    %182 = vector.broadcast %181 : vector<1x128xf32> to vector<2x128xf32>
    %183 = arith.addf %180, %182 : vector<2x128xf32>
    %c0_56 = arith.constant 0 : index
    %c0_57 = arith.constant 0 : index
    %184 = vector.load %arg4[%c0_56, %c0_57] : memref<2x128xf32, #tpu.memory_space<vmem>>, vector<2x128xf32>
    tpu.vector_store %arg4[%c0_56, %c0_57], %183 {strides = array<i32>} : memref<2x128xf32, #tpu.memory_space<vmem>>, vector<2x128xf32>,
    return
  }
}

</mosaic_0001>

<llo_original>
// kernel: modelo_ind_forward.1
$region0: #{modelo_ind_forward.1}
  #allocation0 [shape = 'u32[]', space=smem, size = 0x4, offset = 0x4, fixed_abs, tag = 'smem constant byte address 0x4 - core index']
  #allocation1 [shape = 'u32[144,128]{1,0:T(1,128)}', space=vmem, size = 0x12000, scoped, tag = 'internal scratch']
  %s0 = inlined_call_operand.vmem [shape: f32[2,8,128], index: 0, kind: input, shape index: {}]
  %s1 = inlined_call_operand.vmem [shape: f32[32,128], index: 1, kind: input, shape index: {}]
  %s2 = inlined_call_operand.vmem [shape: f32[32,128], index: 2, kind: input, shape index: {}]
  %s3 = inlined_call_operand.vmem [shape: f32[1,128], index: 3, kind: input, shape index: {}]
  %s4 = inlined_call_operand.hbm [shape: f32[2,128], index: 4, kind: output, shape index: {}]
  %s5 = sld [smem:[#allocation0]]
  $region26: #{modelo_ind_forward.1} parent=0
    _
  %s7 = ssub.s32 1, %s5
  %s8 = scalar_select 0, %s7, %s5
  $region1: #{modelo_ind_forward.1} parent=0
    #allocation2 [shape = 'u8[1024]{0}', space=vmem, size = 0x400, scoped, tag = 'output window, operand 0, single buffered']
    #allocation3 [shape = 's32[1]{0}', space=sflag, size = 0x4, scoped, tag = 'scoped memory for modelo_ind_forward.1']
    %9 = vsyncpa [#allocation3], 0
    // Predicated region
    $region2: #{modelo_ind_forward.1} parent=1 // pred_check
      _
    $region3: #{modelo_ind_forward.1} parent=1 // pred_check_branch
      %11 = sbr.rel (0) target = $region5
    $region4: #{modelo_ind_forward.1} parent=1 // pred_region
      _
    $region5: #{modelo_ind_forward.1} parent=1 // pred_fallthru
      _
    // Predicated region
    $region6: #{modelo_ind_forward.1} parent=1 // pred_check
      _
    $region7: #{modelo_ind_forward.1} parent=1 // pred_check_branch
      %13 = sbr.rel (0) target = $region9
    $region8: #{modelo_ind_forward.1} parent=1 // pred_region
      _
    $region9: #{modelo_ind_forward.1} parent=1 // pred_fallthru
      _
    // Predicated region
    $region10: #{modelo_ind_forward.1} parent=1 // pred_check
      _
    $region11: #{modelo_ind_forward.1} parent=1 // pred_check_branch
      %15 = sbr.rel (0) target = $region13
    $region12: #{modelo_ind_forward.1} parent=1 // pred_region
      _
    $region13: #{modelo_ind_forward.1} parent=1 // pred_fallthru
      _
    // Predicated region
    $region14: #{modelo_ind_forward.1} parent=1 // pred_check
      _
    $region15: #{modelo_ind_forward.1} parent=1 // pred_check_branch
      %17 = sbr.rel (0) target = $region17
    $region16: #{modelo_ind_forward.1} parent=1 // pred_region
      _
    $region17: #{modelo_ind_forward.1} parent=1 // pred_fallthru
      _
    %v18 = vld [vmem:[%s1] sm:$0xff]
    %v19 = vld [vmem:[%s1 + $0x8] sm:$0xff]
    %v20 = vld [vmem:[%s1 + $0x10] sm:$0xff]
    %v21 = vld [vmem:[%s1 + $0x18] sm:$0xff]
    %v22 = vld [vmem:[%s0] sm:$0x1]
    %v23 = vld [vmem:[%s0 + $0x8] sm:$0x1]
    %vm24 = vcmask 261120
    %v26 = vsel %vm24, 0.0, 0
    %28 = vmatprep.subr.mxu0 0.0
    %29 = vmatpush1.msra.mxu0 %v18
    %30 = vmatprep.subr.mxu0 0.0
    %31 = vmatpush1.msra.mxu0 %v19
    %32 = vmatprep.subr.mxu0 0.0
    %33 = vmatpush1.msra.mxu0 %v20
    %34 = vmatprep.subr.mxu0 0.0
    %35 = vmatpush1.msra.mxu0 %v21
    %36 = vmatprep.subr.mxu0 0.0
    %37 = vmatpush1.msra.mxu0 0.0
    %38 = vmatprep.subr.mxu0 0.0
    %39 = vmatpush1.msra.mxu0 0.0
    %40 = vmatprep.subr.mxu0 0.0
    %41 = vmatpush1.msra.mxu0 0.0
    %42 = vmatprep.subr.mxu0 0.0
    %43 = vmatpush1.msra.mxu0 0.0
    %44 = vmatprep.subr.mxu0 0.0
    %45 = vmatpush1.msra.mxu0 0.0
    %46 = vmatprep.subr.mxu0 0.0
    %47 = vmatpush1.msra.mxu0 0.0
    %48 = vmatprep.subr.mxu0 0.0
    %49 = vmatpush1.msra.mxu0 0.0
    %50 = vmatprep.subr.mxu0 0.0
    %51 = vmatpush1.msra.mxu0 0.0
    %52 = vmatprep.subr.mxu0 0.0
    %53 = vmatpush1.msra.mxu0 0.0
    %54 = vmatprep.subr.mxu0 0.0
    %55 = vmatpush1.msra.mxu0 0.0
    %56 = vmatprep.subr.mxu0 0.0
    %57 = vmatpush1.msra.mxu0 0.0
    %58 = vmatprep.subr.mxu0 0.0
    %59 = vmatpush1.msra.mxu0 0.0
    %60 = vmatprep.subr.mxu0 0.0
    %61 = vmatpush1.msra.mxu0 0.0
    %62 = vmatprep.subr.mxu0 0.0
    %63 = vmatpush1.msra.mxu0 0.0
    %64 = vmatprep.subr.mxu0 0.0
    %65 = vmatpush1.msra.mxu0 0.0
    %66 = vmatprep.subr.mxu0 0.0
    %67 = vmatpush1.msra.mxu0 0.0
    %68 = vmatprep.subr.mxu0 0.0
    %69 = vmatpush1.msra.mxu0 0.0
    %70 = vmatprep.subr.mxu0 0.0
    %71 = vmatpush1.msra.mxu0 0.0
    %72 = vmatprep.subr.mxu0 0.0
    %73 = vmatpush1.msra.mxu0 0.0
    %74 = vmatprep.subr.mxu0 0.0
    %75 = vmatpush1.msra.mxu0 0.0
    %76 = vmatprep.subr.mxu0 0.0
    %77 = vmatpush1.msra.mxu0 0.0
    %78 = vmatprep.subr.mxu0 0.0
    %79 = vmatpush1.msra.mxu0 0.0
    %80 = vmatprep.subr.mxu0 0.0
    %81 = vmatpush1.msra.mxu0 0.0
    %82 = vmatprep.subr.mxu0 0.0
    %83 = vmatpush1.msra.mxu0 0.0
    %84 = vmatprep.subr.mxu0 0.0
    %85 = vmatpush1.msra.mxu0 0.0
    %86 = vmatprep.subr.mxu0 0.0
    %87 = vmatpush1.msra.mxu0 0.0
    %88 = vmatprep.subr.mxu0 0.0
    %89 = vmatpush1.msra.mxu0 0.0
    %90 = vmatprep.subr.mxu0 0.0
    %91 = vmatpush1.msra.mxu0 0.0
    %92 = vmatprep.mubr.f32.mxu0 0.0
    %93 = vmatmul.mubr.f32.gmra.mrb[0].mxu0 %v26
    %v94 = vpop.f32.mrb[0].mxu0
    %v95 = vadd.f32 0.0, %v94
    %v96 = vpop.f32.mrb[0].mxu0
    %97 = vdwg.mxu0
    %v99 = vrot.slane %v95, 1
    %v102 = vadd.f32 %v22, %v95
    %v103 = vadd.f32 %v23, %v99
    %v104 = vxor.u32 %v102, 2147483648
    %v105 = vxor.u32 %v103, 2147483648
    %v106 = vmul.f32 %v104, 1.442695
    %v107 = vpow.pop %v106
    %v108 = vmul.f32 %v105, 1.442695
    %v109 = vpow.pop %v108
    %v110 = vadd.f32 %v107, 1.0
    %v111 = vadd.f32 %v109, 1.0
    %v112 = vrcp.pop %v110
    %v113 = vmul.f32 1.0, %v112
    %v114 = vrcp.pop %v111
    %v115 = vmul.f32 1.0, %v114
    %v116 = vmul.f32 %v113, 2.0
    %v117 = vmul.f32 %v115, 2.0
    %v118 = vsub.f32 %v116, 1.0
    %v119 = vsub.f32 %v117, 1.0
    %v120 = vmul.f32 %v113, 0.0
    %v121 = vmul.f32 %v115, 0.0
    %124 = vrot.lane.b32.xlu0 %v118, 64
    %v125 = vpop.permute.xlu0 %124
    %126 = vrot.lane.b32.xlu0 %v119, 64
    %v127 = vpop.permute.xlu0 %126
    %v130 = vmul.f32 %v113, %v125
    %v131 = vmul.f32 %v115, %v127
    %134 = vrot.lane.b32.xlu0 %v130, 32
    %v135 = vpop.permute.xlu0 %134
    %136 = vrot.lane.b32.xlu0 %v131, 32
    %v137 = vpop.permute.xlu0 %136
    %v140 = vadd.f32 %v120, %v135
    %v141 = vadd.f32 %v121, %v137
    %v142 = vtanh.pop %v140
    %v143 = vtanh.pop %v141
    %146 = vrot.lane.b32.xlu0 %v142, 64
    %v147 = vpop.permute.xlu0 %146
    %148 = vrot.lane.b32.xlu0 %v143, 64
    %v149 = vpop.permute.xlu0 %148
    %v152 = vmul.f32 %v113, %v147
    %v153 = vmul.f32 %v115, %v149
    %v154 = vld [vmem:[%s0 + $0x1] sm:$0x1]
    %v155 = vld [vmem:[%s0 + $0x9] sm:$0x1]
    %v158 = vrot.slane %v153, 7
    %vm159 = vcmask 1041409
    %v160 = vsel %vm159, %v158, %v152
    %161 = vrot.lane.b32.xlu0 %v160, 32
    %v162 = vpop.permute.xlu0 %161
    %v163 = vsel %vm24, %v162, 0
    %165 = vmatprep.subr.mxu0 0.0
    %166 = vmatpush1.msra.mxu0 %v18
    %167 = vmatprep.subr.mxu0 0.0
    %168 = vmatpush1.msra.mxu0 %v19
    %169 = vmatprep.subr.mxu0 0.0
    %170 = vmatpush1.msra.mxu0 %v20
    %171 = vmatprep.subr.mxu0 0.0
    %172 = vmatpush1.msra.mxu0 %v21
    %173 = vmatprep.subr.mxu0 0.0
    %174 = vmatpush1.msra.mxu0 0.0
    %175 = vmatprep.subr.mxu0 0.0
    %176 = vmatpush1.msra.mxu0 0.0
    %177 = vmatprep.subr.mxu0 0.0
    %178 = vmatpush1.msra.mxu0 0.0
    %179 = vmatprep.subr.mxu0 0.0
    %180 = vmatpush1.msra.mxu0 0.0
    %181 = vmatprep.subr.mxu0 0.0
    %182 = vmatpush1.msra.mxu0 0.0
    %183 = vmatprep.subr.mxu0 0.0
    %184 = vmatpush1.msra.mxu0 0.0
    %185 = vmatprep.subr.mxu0 0.0
    %186 = vmatpush1.msra.mxu0 0.0
    %187 = vmatprep.subr.mxu0 0.0
    %188 = vmatpush1.msra.mxu0 0.0
    %189 = vmatprep.subr.mxu0 0.0
    %190 = vmatpush1.msra.mxu0 0.0
    %191 = vmatprep.subr.mxu0 0.0
    %192 = vmatpush1.msra.mxu0 0.0
    %193 = vmatprep.subr.mxu0 0.0
    %194 = vmatpush1.msra.mxu0 0.0
    %195 = vmatprep.subr.mxu0 0.0
    %196 = vmatpush1.msra.mxu0 0.0
    %197 = vmatprep.subr.mxu0 0.0
    %198 = vmatpush1.msra.mxu0 0.0
    %199 = vmatprep.subr.mxu0 0.0
    %200 = vmatpush1.msra.mxu0 0.0
    %201 = vmatprep.subr.mxu0 0.0
    %202 = vmatpush1.msra.mxu0 0.0
    %203 = vmatprep.subr.mxu0 0.0
    %204 = vmatpush1.msra.mxu0 0.0
    %205 = vmatprep.subr.mxu0 0.0
    %206 = vmatpush1.msra.mxu0 0.0
    %207 = vmatprep.subr.mxu0 0.0
    %208 = vmatpush1.msra.mxu0 0.0
    %209 = vmatprep.subr.mxu0 0.0
    %210 = vmatpush1.msra.mxu0 0.0
    %211 = vmatprep.subr.mxu0 0.0
    %212 = vmatpush1.msra.mxu0 0.0
    %213 = vmatprep.subr.mxu0 0.0
    %214 = vmatpush1.msra.mxu0 0.0
    %215 = vmatprep.subr.mxu0 0.0
    %216 = vmatpush1.msra.mxu0 0.0
    %217 = vmatprep.subr.mxu0 0.0
    %218 = vmatpush1.msra.mxu0 0.0
    %219 = vmatprep.subr.mxu0 0.0
    %220 = vmatpush1.msra.mxu0 0.0
    %221 = vmatprep.subr.mxu0 0.0
    %222 = vmatpush1.msra.mxu0 0.0
    %223 = vmatprep.subr.mxu0 0.0
    %224 = vmatpush1.msra.mxu0 0.0
    %225 = vmatprep.subr.mxu0 0.0
    %226 = vmatpush1.msra.mxu0 0.0
    %227 = vmatprep.subr.mxu0 0.0
    %228 = vmatpush1.msra.mxu0 0.0
    %229 = vmatprep.mubr.f32.mxu0 0.0
    %230 = vmatmul.mubr.f32.gmra.mrb[0].mxu0 %v163
    %v231 = vpop.f32.mrb[0].mxu0
    %v232 = vadd.f32 0.0, %v231
    %v233 = vpop.f32.mrb[0].mxu0
    %234 = vdwg.mxu0
    %v236 = vrot.slane %v232, 1
    %v239 = vadd.f32 %v154, %v232
    %v240 = vadd.f32 %v155, %v236
    %v241 = vxor.u32 %v239, 2147483648
    %v242 = vxor.u32 %v240, 2147483648
    %v243 = vmul.f32 %v241, 1.442695
    %v244 = vpow.pop %v243
    %v245 = vmul.f32 %v242, 1.442695
    %v246 = vpow.pop %v245
    %v247 = vadd.f32 %v244, 1.0
    %v248 = vadd.f32 %v246, 1.0
    %v249 = vrcp.pop %v247
    %v250 = vmul.f32 1.0, %v249
    %v251 = vrcp.pop %v248
    %v252 = vmul.f32 1.0, %v251
    %v253 = vmul.f32 %v250, 2.0
    %v254 = vmul.f32 %v252, 2.0
    %v255 = vsub.f32 %v253, 1.0
    %v256 = vsub.f32 %v254, 1.0
    %v257 = vmul.f32 %v250, %v140
    %v258 = vmul.f32 %v252, %v141
    %261 = vrot.lane.b32.xlu0 %v255, 64
    %v262 = vpop.permute.xlu0 %261
    %263 = vrot.lane.b32.xlu0 %v256, 64
    %v264 = vpop.permute.xlu0 %263
    %v267 = vmul.f32 %v250, %v262
    %v268 = vmul.f32 %v252, %v264
    %271 = vrot.lane.b32.xlu0 %v267, 32
    %v272 = vpop.permute.xlu0 %271
    %273 = vrot.lane.b32.xlu0 %v268, 32
    %v274 = vpop.permute.xlu0 %273
    %v277 = vadd.f32 %v257, %v272
    %v278 = vadd.f32 %v258, %v274
    %v279 = vtanh.pop %v277
    %v280 = vtanh.pop %v278
    %283 = vrot.lane.b32.xlu0 %v279, 64
    %v284 = vpop.permute.xlu0 %283
    %285 = vrot.lane.b32.xlu0 %v280, 64
    %v286 = vpop.permute.xlu0 %285
    %v289 = vmul.f32 %v250, %v284
    %v290 = vmul.f32 %v252, %v286
    %v291 = vld [vmem:[%s0 + $0x2] sm:$0x1]
    %v292 = vld [vmem:[%s0 + $0xa] sm:$0x1]
    %v295 = vrot.slane %v290, 7
    %v296 = vsel %vm159, %v295, %v289
    %297 = vrot.lane.b32.xlu0 %v296, 32
    %v298 = vpop.permute.xlu0 %297
    %v299 = vsel %vm24, %v298, 0
    %301 = vmatprep.subr.mxu0 0.0
    %302 = vmatpush1.msra.mxu0 %v18
    %303 = vmatprep.subr.mxu0 0.0
    %304 = vmatpush1.msra.mxu0 %v19
    %305 = vmatprep.subr.mxu0 0.0
    %306 = vmatpush1.msra.mxu0 %v20
    %307 = vmatprep.subr.mxu0 0.0
    %308 = vmatpush1.msra.mxu0 %v21
    %309 = vmatprep.subr.mxu0 0.0
    %310 = vmatpush1.msra.mxu0 0.0
    %311 = vmatprep.subr.mxu0 0.0
    %312 = vmatpush1.msra.mxu0 0.0
    %313 = vmatprep.subr.mxu0 0.0
    %314 = vmatpush1.msra.mxu0 0.0
    %315 = vmatprep.subr.mxu0 0.0
    %316 = vmatpush1.msra.mxu0 0.0
    %317 = vmatprep.subr.mxu0 0.0
    %318 = vmatpush1.msra.mxu0 0.0
    %319 = vmatprep.subr.mxu0 0.0
    %320 = vmatpush1.msra.mxu0 0.0
    %321 = vmatprep.subr.mxu0 0.0
    %322 = vmatpush1.msra.mxu0 0.0
    %323 = vmatprep.subr.mxu0 0.0
    %324 = vmatpush1.msra.mxu0 0.0
    %325 = vmatprep.subr.mxu0 0.0
    %326 = vmatpush1.msra.mxu0 0.0
    %327 = vmatprep.subr.mxu0 0.0
    %328 = vmatpush1.msra.mxu0 0.0
    %329 = vmatprep.subr.mxu0 0.0
    %330 = vmatpush1.msra.mxu0 0.0
    %331 = vmatprep.subr.mxu0 0.0
    %332 = vmatpush1.msra.mxu0 0.0
    %333 = vmatprep.subr.mxu0 0.0
    %334 = vmatpush1.msra.mxu0 0.0
    %335 = vmatprep.subr.mxu0 0.0
    %336 = vmatpush1.msra.mxu0 0.0
    %337 = vmatprep.subr.mxu0 0.0
    %338 = vmatpush1.msra.mxu0 0.0
    %339 = vmatprep.subr.mxu0 0.0
    %340 = vmatpush1.msra.mxu0 0.0
    %341 = vmatprep.subr.mxu0 0.0
    %342 = vmatpush1.msra.mxu0 0.0
    %343 = vmatprep.subr.mxu0 0.0
    %344 = vmatpush1.msra.mxu0 0.0
    %345 = vmatprep.subr.mxu0 0.0
    %346 = vmatpush1.msra.mxu0 0.0
    %347 = vmatprep.subr.mxu0 0.0
    %348 = vmatpush1.msra.mxu0 0.0
    %349 = vmatprep.subr.mxu0 0.0
    %350 = vmatpush1.msra.mxu0 0.0
    %351 = vmatprep.subr.mxu0 0.0
    %352 = vmatpush1.msra.mxu0 0.0
    %353 = vmatprep.subr.mxu0 0.0
    %354 = vmatpush1.msra.mxu0 0.0
    %355 = vmatprep.subr.mxu0 0.0
    %356 = vmatpush1.msra.mxu0 0.0
    %357 = vmatprep.subr.mxu0 0.0
    %358 = vmatpush1.msra.mxu0 0.0
    %359 = vmatprep.subr.mxu0 0.0
    %360 = vmatpush1.msra.mxu0 0.0
    %361 = vmatprep.subr.mxu0 0.0
    %362 = vmatpush1.msra.mxu0 0.0
    %363 = vmatprep.subr.mxu0 0.0
    %364 = vmatpush1.msra.mxu0 0.0
    %365 = vmatprep.mubr.f32.mxu0 0.0
    %366 = vmatmul.mubr.f32.gmra.mrb[0].mxu0 %v299
    %v367 = vpop.f32.mrb[0].mxu0
    %v368 = vadd.f32 0.0, %v367
    %v369 = vpop.f32.mrb[0].mxu0
    %370 = vdwg.mxu0
    %v372 = vrot.slane %v368, 1
    %v375 = vadd.f32 %v291, %v368
    %v376 = vadd.f32 %v292, %v372
    %v377 = vxor.u32 %v375, 2147483648
    %v378 = vxor.u32 %v376, 2147483648
    %v379 = vmul.f32 %v377, 1.442695
    %v380 = vpow.pop %v379
    %v381 = vmul.f32 %v378, 1.442695
    %v382 = vpow.pop %v381
    %v383 = vadd.f32 %v380, 1.0
    %v384 = vadd.f32 %v382, 1.0
    %v385 = vrcp.pop %v383
    %v386 = vmul.f32 1.0, %v385
    %v387 = vrcp.pop %v384
    %v388 = vmul.f32 1.0, %v387
    %v389 = vmul.f32 %v386, 2.0
    %v390 = vmul.f32 %v388, 2.0
    %v391 = vsub.f32 %v389, 1.0
    %v392 = vsub.f32 %v390, 1.0
    %v393 = vmul.f32 %v386, %v277
    %v394 = vmul.f32 %v388, %v278
    %397 = vrot.lane.b32.xlu0 %v391, 64
    %v398 = vpop.permute.xlu0 %397
    %399 = vrot.lane.b32.xlu0 %v392, 64
    %v400 = vpop.permute.xlu0 %399
    %v403 = vmul.f32 %v386, %v398
    %v404 = vmul.f32 %v388, %v400
    %407 = vrot.lane.b32.xlu0 %v403, 32
    %v408 = vpop.permute.xlu0 %407
    %409 = vrot.lane.b32.xlu0 %v404, 32
    %v410 = vpop.permute.xlu0 %409
    %v413 = vadd.f32 %v393, %v408
    %v414 = vadd.f32 %v394, %v410
    %v415 = vtanh.pop %v413
    %v416 = vtanh.pop %v414
    %419 = vrot.lane.b32.xlu0 %v415, 64
    %v420 = vpop.permute.xlu0 %419
    %421 = vrot.lane.b32.xlu0 %v416, 64
    %v422 = vpop.permute.xlu0 %421
    %v425 = vmul.f32 %v386, %v420
    %v426 = vmul.f32 %v388, %v422
    %v427 = vld [vmem:[%s0 + $0x3] sm:$0x1]
    %v428 = vld [vmem:[%s0 + $0xb] sm:$0x1]
    %v431 = vrot.slane %v426, 7
    %v432 = vsel %vm159, %v431, %v425
    %433 = vrot.lane.b32.xlu0 %v432, 32
    %v434 = vpop.permute.xlu0 %433
    %v435 = vsel %vm24, %v434, 0
    %437 = vmatprep.subr.mxu0 0.0
    %438 = vmatpush1.msra.mxu0 %v18
    %439 = vmatprep.subr.mxu0 0.0
    %440 = vmatpush1.msra.mxu0 %v19
    %441 = vmatprep.subr.mxu0 0.0
    %442 = vmatpush1.msra.mxu0 %v20
    %443 = vmatprep.subr.mxu0 0.0
    %444 = vmatpush1.msra.mxu0 %v21
    %445 = vmatprep.subr.mxu0 0.0
    %446 = vmatpush1.msra.mxu0 0.0
    %447 = vmatprep.subr.mxu0 0.0
    %448 = vmatpush1.msra.mxu0 0.0
    %449 = vmatprep.subr.mxu0 0.0
    %450 = vmatpush1.msra.mxu0 0.0
    %451 = vmatprep.subr.mxu0 0.0
    %452 = vmatpush1.msra.mxu0 0.0
    %453 = vmatprep.subr.mxu0 0.0
    %454 = vmatpush1.msra.mxu0 0.0
    %455 = vmatprep.subr.mxu0 0.0
    %456 = vmatpush1.msra.mxu0 0.0
    %457 = vmatprep.subr.mxu0 0.0
    %458 = vmatpush1.msra.mxu0 0.0
    %459 = vmatprep.subr.mxu0 0.0
    %460 = vmatpush1.msra.mxu0 0.0
    %461 = vmatprep.subr.mxu0 0.0
    %462 = vmatpush1.msra.mxu0 0.0
    %463 = vmatprep.subr.mxu0 0.0
    %464 = vmatpush1.msra.mxu0 0.0
    %465 = vmatprep.subr.mxu0 0.0
    %466 = vmatpush1.msra.mxu0 0.0
    %467 = vmatprep.subr.mxu0 0.0
    %468 = vmatpush1.msra.mxu0 0.0
    %469 = vmatprep.subr.mxu0 0.0
    %470 = vmatpush1.msra.mxu0 0.0
    %471 = vmatprep.subr.mxu0 0.0
    %472 = vmatpush1.msra.mxu0 0.0
    %473 = vmatprep.subr.mxu0 0.0
    %474 = vmatpush1.msra.mxu0 0.0
    %475 = vmatprep.subr.mxu0 0.0
    %476 = vmatpush1.msra.mxu0 0.0
    %477 = vmatprep.subr.mxu0 0.0
    %478 = vmatpush1.msra.mxu0 0.0
    %479 = vmatprep.subr.mxu0 0.0
    %480 = vmatpush1.msra.mxu0 0.0
    %481 = vmatprep.subr.mxu0 0.0
    %482 = vmatpush1.msra.mxu0 0.0
    %483 = vmatprep.subr.mxu0 0.0
    %484 = vmatpush1.msra.mxu0 0.0
    %485 = vmatprep.subr.mxu0 0.0
    %486 = vmatpush1.msra.mxu0 0.0
    %487 = vmatprep.subr.mxu0 0.0
    %488 = vmatpush1.msra.mxu0 0.0
    %489 = vmatprep.subr.mxu0 0.0
    %490 = vmatpush1.msra.mxu0 0.0
    %491 = vmatprep.subr.mxu0 0.0
    %492 = vmatpush1.msra.mxu0 0.0
    %493 = vmatprep.subr.mxu0 0.0
    %494 = vmatpush1.msra.mxu0 0.0
    %495 = vmatprep.subr.mxu0 0.0
    %496 = vmatpush1.msra.mxu0 0.0
    %497 = vmatprep.subr.mxu0 0.0
    %498 = vmatpush1.msra.mxu0 0.0
    %499 = vmatprep.subr.mxu0 0.0
    %500 = vmatpush1.msra.mxu0 0.0
    %501 = vmatprep.mubr.f32.mxu0 0.0
    %502 = vmatmul.mubr.f32.gmra.mrb[0].mxu0 %v435
    %v503 = vpop.f32.mrb[0].mxu0
    %v504 = vadd.f32 0.0, %v503
    %v505 = vpop.f32.mrb[0].mxu0
    %506 = vdwg.mxu0
    %v508 = vrot.slane %v504, 1
    %v511 = vadd.f32 %v427, %v504
    %v512 = vadd.f32 %v428, %v508
    %v513 = vxor.u32 %v511, 2147483648
    %v514 = vxor.u32 %v512, 2147483648
    %v515 = vmul.f32 %v513, 1.442695
    %v516 = vpow.pop %v515
    %v517 = vmul.f32 %v514, 1.442695
    %v518 = vpow.pop %v517
    %v519 = vadd.f32 %v516, 1.0
    %v520 = vadd.f32 %v518, 1.0
    %v521 = vrcp.pop %v519
    %v522 = vmul.f32 1.0, %v521
    %v523 = vrcp.pop %v520
    %v524 = vmul.f32 1.0, %v523
    %v525 = vmul.f32 %v522, 2.0
    %v526 = vmul.f32 %v524, 2.0
    %v527 = vsub.f32 %v525, 1.0
    %v528 = vsub.f32 %v526, 1.0
    %v529 = vmul.f32 %v522, %v413
    %v530 = vmul.f32 %v524, %v414
    %533 = vrot.lane.b32.xlu0 %v527, 64
    %v534 = vpop.permute.xlu0 %533
    %535 = vrot.lane.b32.xlu0 %v528, 64
    %v536 = vpop.permute.xlu0 %535
    %v539 = vmul.f32 %v522, %v534
    %v540 = vmul.f32 %v524, %v536
    %543 = vrot.lane.b32.xlu0 %v539, 32
    %v544 = vpop.permute.xlu0 %543
    %545 = vrot.lane.b32.xlu0 %v540, 32
    %v546 = vpop.permute.xlu0 %545
    %v549 = vadd.f32 %v529, %v544
    %v550 = vadd.f32 %v530, %v546
    %v551 = vtanh.pop %v549
    %v552 = vtanh.pop %v550
    %555 = vrot.lane.b32.xlu0 %v551, 64
    %v556 = vpop.permute.xlu0 %555
    %557 = vrot.lane.b32.xlu0 %v552, 64
    %v558 = vpop.permute.xlu0 %557
    %v561 = vmul.f32 %v522, %v556
    %v562 = vmul.f32 %v524, %v558
    %v563 = vld [vmem:[%s0 + $0x4] sm:$0x1]
    %v564 = vld [vmem:[%s0 + $0xc] sm:$0x1]
    %v567 = vrot.slane %v562, 7
    %v568 = vsel %vm159, %v567, %v561
    %569 = vrot.lane.b32.xlu0 %v568, 32
    %v570 = vpop.permute.xlu0 %569
    %v571 = vsel %vm24, %v570, 0
    %573 = vmatprep.subr.mxu0 0.0
    %574 = vmatpush1.msra.mxu0 %v18
    %575 = vmatprep.subr.mxu0 0.0
    %576 = vmatpush1.msra.mxu0 %v19
    %577 = vmatprep.subr.mxu0 0.0
    %578 = vmatpush1.msra.mxu0 %v20
    %579 = vmatprep.subr.mxu0 0.0
    %580 = vmatpush1.msra.mxu0 %v21
    %581 = vmatprep.subr.mxu0 0.0
    %582 = vmatpush1.msra.mxu0 0.0
    %583 = vmatprep.subr.mxu0 0.0
    %584 = vmatpush1.msra.mxu0 0.0
    %585 = vmatprep.subr.mxu0 0.0
    %586 = vmatpush1.msra.mxu0 0.0
    %587 = vmatprep.subr.mxu0 0.0
    %588 = vmatpush1.msra.mxu0 0.0
    %589 = vmatprep.subr.mxu0 0.0
    %590 = vmatpush1.msra.mxu0 0.0
    %591 = vmatprep.subr.mxu0 0.0
    %592 = vmatpush1.msra.mxu0 0.0
    %593 = vmatprep.subr.mxu0 0.0
    %594 = vmatpush1.msra.mxu0 0.0
    %595 = vmatprep.subr.mxu0 0.0
    %596 = vmatpush1.msra.mxu0 0.0
    %597 = vmatprep.subr.mxu0 0.0
    %598 = vmatpush1.msra.mxu0 0.0
    %599 = vmatprep.subr.mxu0 0.0
    %600 = vmatpush1.msra.mxu0 0.0
    %601 = vmatprep.subr.mxu0 0.0
    %602 = vmatpush1.msra.mxu0 0.0
    %603 = vmatprep.subr.mxu0 0.0
    %604 = vmatpush1.msra.mxu0 0.0
    %605 = vmatprep.subr.mxu0 0.0
    %606 = vmatpush1.msra.mxu0 0.0
    %607 = vmatprep.subr.mxu0 0.0
    %608 = vmatpush1.msra.mxu0 0.0
    %609 = vmatprep.subr.mxu0 0.0
    %610 = vmatpush1.msra.mxu0 0.0
    %611 = vmatprep.subr.mxu0 0.0
    %612 = vmatpush1.msra.mxu0 0.0
    %613 = vmatprep.subr.mxu0 0.0
    %614 = vmatpush1.msra.mxu0 0.0
    %615 = vmatprep.subr.mxu0 0.0
    %616 = vmatpush1.msra.mxu0 0.0
    %617 = vmatprep.subr.mxu0 0.0
    %618 = vmatpush1.msra.mxu0 0.0
    %619 = vmatprep.subr.mxu0 0.0
    %620 = vmatpush1.msra.mxu0 0.0
    %621 = vmatprep.subr.mxu0 0.0
    %622 = vmatpush1.msra.mxu0 0.0
    %623 = vmatprep.subr.mxu0 0.0
    %624 = vmatpush1.msra.mxu0 0.0
    %625 = vmatprep.subr.mxu0 0.0
    %626 = vmatpush1.msra.mxu0 0.0
    %627 = vmatprep.subr.mxu0 0.0
    %628 = vmatpush1.msra.mxu0 0.0
    %629 = vmatprep.subr.mxu0 0.0
    %630 = vmatpush1.msra.mxu0 0.0
    %631 = vmatprep.subr.mxu0 0.0
    %632 = vmatpush1.msra.mxu0 0.0
    %633 = vmatprep.subr.mxu0 0.0
    %634 = vmatpush1.msra.mxu0 0.0
    %635 = vmatprep.subr.mxu0 0.0
    %636 = vmatpush1.msra.mxu0 0.0
    %637 = vmatprep.mubr.f32.mxu0 0.0
    %638 = vmatmul.mubr.f32.gmra.mrb[0].mxu0 %v571
    %v639 = vpop.f32.mrb[0].mxu0
    %v640 = vadd.f32 0.0, %v639
    %v641 = vpop.f32.mrb[0].mxu0
    %642 = vdwg.mxu0
    %v644 = vrot.slane %v640, 1
    %v647 = vadd.f32 %v563, %v640
    %v648 = vadd.f32 %v564, %v644
    %v649 = vxor.u32 %v647, 2147483648
    %v650 = vxor.u32 %v648, 2147483648
    %v651 = vmul.f32 %v649, 1.442695
    %v652 = vpow.pop %v651
    %v653 = vmul.f32 %v650, 1.442695
    %v654 = vpow.pop %v653
    %v655 = vadd.f32 %v652, 1.0
    %v656 = vadd.f32 %v654, 1.0
    %v657 = vrcp.pop %v655
    %v658 = vmul.f32 1.0, %v657
    %v659 = vrcp.pop %v656
    %v660 = vmul.f32 1.0, %v659
    %v661 = vmul.f32 %v658, 2.0
    %v662 = vmul.f32 %v660, 2.0
    %v663 = vsub.f32 %v661, 1.0
    %v664 = vsub.f32 %v662, 1.0
    %v665 = vmul.f32 %v658, %v549
    %v666 = vmul.f32 %v660, %v550
    %669 = vrot.lane.b32.xlu0 %v663, 64
    %v670 = vpop.permute.xlu0 %669
    %671 = vrot.lane.b32.xlu0 %v664, 64
    %v672 = vpop.permute.xlu0 %671
    %v675 = vmul.f32 %v658, %v670
    %v676 = vmul.f32 %v660, %v672
    %679 = vrot.lane.b32.xlu0 %v675, 32
    %v680 = vpop.permute.xlu0 %679
    %681 = vrot.lane.b32.xlu0 %v676, 32
    %v682 = vpop.permute.xlu0 %681
    %v685 = vadd.f32 %v665, %v680
    %v686 = vadd.f32 %v666, %v682
    %v687 = vtanh.pop %v685
    %v688 = vtanh.pop %v686
    %691 = vrot.lane.b32.xlu0 %v687, 64
    %v692 = vpop.permute.xlu0 %691
    %693 = vrot.lane.b32.xlu0 %v688, 64
    %v694 = vpop.permute.xlu0 %693
    %v697 = vmul.f32 %v658, %v692
    %v698 = vmul.f32 %v660, %v694
    %v699 = vld [vmem:[%s0 + $0x5] sm:$0x1]
    %v700 = vld [vmem:[%s0 + $0xd] sm:$0x1]
    %v703 = vrot.slane %v698, 7
    %v704 = vsel %vm159, %v703, %v697
    %705 = vrot.lane.b32.xlu0 %v704, 32
    %v706 = vpop.permute.xlu0 %705
    %v707 = vsel %vm24, %v706, 0
    %709 = vmatprep.subr.mxu0 0.0
    %710 = vmatpush1.msra.mxu0 %v18
    %711 = vmatprep.subr.mxu0 0.0
    %712 = vmatpush1.msra.mxu0 %v19
    %713 = vmatprep.subr.mxu0 0.0
    %714 = vmatpush1.msra.mxu0 %v20
    %715 = vmatprep.subr.mxu0 0.0
    %716 = vmatpush1.msra.mxu0 %v21
    %717 = vmatprep.subr.mxu0 0.0
    %718 = vmatpush1.msra.mxu0 0.0
    %719 = vmatprep.subr.mxu0 0.0
    %720 = vmatpush1.msra.mxu0 0.0
    %721 = vmatprep.subr.mxu0 0.0
    %722 = vmatpush1.msra.mxu0 0.0
    %723 = vmatprep.subr.mxu0 0.0
    %724 = vmatpush1.msra.mxu0 0.0
    %725 = vmatprep.subr.mxu0 0.0
    %726 = vmatpush1.msra.mxu0 0.0
    %727 = vmatprep.subr.mxu0 0.0
    %728 = vmatpush1.msra.mxu0 0.0
    %729 = vmatprep.subr.mxu0 0.0
    %730 = vmatpush1.msra.mxu0 0.0
    %731 = vmatprep.subr.mxu0 0.0
    %732 = vmatpush1.msra.mxu0 0.0
    %733 = vmatprep.subr.mxu0 0.0
    %734 = vmatpush1.msra.mxu0 0.0
    %735 = vmatprep.subr.mxu0 0.0
    %736 = vmatpush1.msra.mxu0 0.0
    %737 = vmatprep.subr.mxu0 0.0
    %738 = vmatpush1.msra.mxu0 0.0
    %739 = vmatprep.subr.mxu0 0.0
    %740 = vmatpush1.msra.mxu0 0.0
    %741 = vmatprep.subr.mxu0 0.0
    %742 = vmatpush1.msra.mxu0 0.0
    %743 = vmatprep.subr.mxu0 0.0
    %744 = vmatpush1.msra.mxu0 0.0
    %745 = vmatprep.subr.mxu0 0.0
    %746 = vmatpush1.msra.mxu0 0.0
    %747 = vmatprep.subr.mxu0 0.0
    %748 = vmatpush1.msra.mxu0 0.0
    %749 = vmatprep.subr.mxu0 0.0
    %750 = vmatpush1.msra.mxu0 0.0
    %751 = vmatprep.subr.mxu0 0.0
    %752 = vmatpush1.msra.mxu0 0.0
    %753 = vmatprep.subr.mxu0 0.0
    %754 = vmatpush1.msra.mxu0 0.0
    %755 = vmatprep.subr.mxu0 0.0
    %756 = vmatpush1.msra.mxu0 0.0
    %757 = vmatprep.subr.mxu0 0.0
    %758 = vmatpush1.msra.mxu0 0.0
    %759 = vmatprep.subr.mxu0 0.0
    %760 = vmatpush1.msra.mxu0 0.0
    %761 = vmatprep.subr.mxu0 0.0
    %762 = vmatpush1.msra.mxu0 0.0
    %763 = vmatprep.subr.mxu0 0.0
    %764 = vmatpush1.msra.mxu0 0.0
    %765 = vmatprep.subr.mxu0 0.0
    %766 = vmatpush1.msra.mxu0 0.0
    %767 = vmatprep.subr.mxu0 0.0
    %768 = vmatpush1.msra.mxu0 0.0
    %769 = vmatprep.subr.mxu0 0.0
    %770 = vmatpush1.msra.mxu0 0.0
    %771 = vmatprep.subr.mxu0 0.0
    %772 = vmatpush1.msra.mxu0 0.0
    %773 = vmatprep.mubr.f32.mxu0 0.0
    %774 = vmatmul.mubr.f32.gmra.mrb[0].mxu0 %v707
    %v775 = vpop.f32.mrb[0].mxu0
    %v776 = vadd.f32 0.0, %v775
    %v777 = vpop.f32.mrb[0].mxu0
    %778 = vdwg.mxu0
    %v780 = vrot.slane %v776, 1
    %v783 = vadd.f32 %v699, %v776
    %v784 = vadd.f32 %v700, %v780
    %v785 = vxor.u32 %v783, 2147483648
    %v786 = vxor.u32 %v784, 2147483648
    %v787 = vmul.f32 %v785, 1.442695
    %v788 = vpow.pop %v787
    %v789 = vmul.f32 %v786, 1.442695
    %v790 = vpow.pop %v789
    %v791 = vadd.f32 %v788, 1.0
    %v792 = vadd.f32 %v790, 1.0
    %v793 = vrcp.pop %v791
    %v794 = vmul.f32 1.0, %v793
    %v795 = vrcp.pop %v792
    %v796 = vmul.f32 1.0, %v795
    %v797 = vmul.f32 %v794, 2.0
    %v798 = vmul.f32 %v796, 2.0
    %v799 = vsub.f32 %v797, 1.0
    %v800 = vsub.f32 %v798, 1.0
    %v801 = vmul.f32 %v794, %v685
    %v802 = vmul.f32 %v796, %v686
    %805 = vrot.lane.b32.xlu0 %v799, 64
    %v806 = vpop.permute.xlu0 %805
    %807 = vrot.lane.b32.xlu0 %v800, 64
    %v808 = vpop.permute.xlu0 %807
    %v811 = vmul.f32 %v794, %v806
    %v812 = vmul.f32 %v796, %v808
    %815 = vrot.lane.b32.xlu0 %v811, 32
    %v816 = vpop.permute.xlu0 %815
    %817 = vrot.lane.b32.xlu0 %v812, 32
    %v818 = vpop.permute.xlu0 %817
    %v821 = vadd.f32 %v801, %v816
    %v822 = vadd.f32 %v802, %v818
    %v823 = vtanh.pop %v821
    %v824 = vtanh.pop %v822
    %827 = vrot.lane.b32.xlu0 %v823, 64
    %v828 = vpop.permute.xlu0 %827
    %829 = vrot.lane.b32.xlu0 %v824, 64
    %v830 = vpop.permute.xlu0 %829
    %v833 = vmul.f32 %v794, %v828
    %v834 = vmul.f32 %v796, %v830
    %v835 = vld [vmem:[%s0 + $0x6] sm:$0x1]
    %v836 = vld [vmem:[%s0 + $0xe] sm:$0x1]
    %v839 = vrot.slane %v834, 7
    %v840 = vsel %vm159, %v839, %v833
    %841 = vrot.lane.b32.xlu0 %v840, 32
    %v842 = vpop.permute.xlu0 %841
    %v843 = vsel %vm24, %v842, 0
    %845 = vmatprep.subr.mxu0 0.0
    %846 = vmatpush1.msra.mxu0 %v18
    %847 = vmatprep.subr.mxu0 0.0
    %848 = vmatpush1.msra.mxu0 %v19
    %849 = vmatprep.subr.mxu0 0.0
    %850 = vmatpush1.msra.mxu0 %v20
    %851 = vmatprep.subr.mxu0 0.0
    %852 = vmatpush1.msra.mxu0 %v21
    %853 = vmatprep.subr.mxu0 0.0
    %854 = vmatpush1.msra.mxu0 0.0
    %855 = vmatprep.subr.mxu0 0.0
    %856 = vmatpush1.msra.mxu0 0.0
    %857 = vmatprep.subr.mxu0 0.0
    %858 = vmatpush1.msra.mxu0 0.0
    %859 = vmatprep.subr.mxu0 0.0
    %860 = vmatpush1.msra.mxu0 0.0
    %861 = vmatprep.subr.mxu0 0.0
    %862 = vmatpush1.msra.mxu0 0.0
    %863 = vmatprep.subr.mxu0 0.0
    %864 = vmatpush1.msra.mxu0 0.0
    %865 = vmatprep.subr.mxu0 0.0
    %866 = vmatpush1.msra.mxu0 0.0
    %867 = vmatprep.subr.mxu0 0.0
    %868 = vmatpush1.msra.mxu0 0.0
    %869 = vmatprep.subr.mxu0 0.0
    %870 = vmatpush1.msra.mxu0 0.0
    %871 = vmatprep.subr.mxu0 0.0
    %872 = vmatpush1.msra.mxu0 0.0
    %873 = vmatprep.subr.mxu0 0.0
    %874 = vmatpush1.msra.mxu0 0.0
    %875 = vmatprep.subr.mxu0 0.0
    %876 = vmatpush1.msra.mxu0 0.0
    %877 = vmatprep.subr.mxu0 0.0
    %878 = vmatpush1.msra.mxu0 0.0
    %879 = vmatprep.subr.mxu0 0.0
    %880 = vmatpush1.msra.mxu0 0.0
    %881 = vmatprep.subr.mxu0 0.0
    %882 = vmatpush1.msra.mxu0 0.0
    %883 = vmatprep.subr.mxu0 0.0
    %884 = vmatpush1.msra.mxu0 0.0
    %885 = vmatprep.subr.mxu0 0.0
    %886 = vmatpush1.msra.mxu0 0.0
    %887 = vmatprep.subr.mxu0 0.0
    %888 = vmatpush1.msra.mxu0 0.0
    %889 = vmatprep.subr.mxu0 0.0
    %890 = vmatpush1.msra.mxu0 0.0
    %891 = vmatprep.subr.mxu0 0.0
    %892 = vmatpush1.msra.mxu0 0.0
    %893 = vmatprep.subr.mxu0 0.0
    %894 = vmatpush1.msra.mxu0 0.0
    %895 = vmatprep.subr.mxu0 0.0
    %896 = vmatpush1.msra.mxu0 0.0
    %897 = vmatprep.subr.mxu0 0.0
    %898 = vmatpush1.msra.mxu0 0.0
    %899 = vmatprep.subr.mxu0 0.0
    %900 = vmatpush1.msra.mxu0 0.0
    %901 = vmatprep.subr.mxu0 0.0
    %902 = vmatpush1.msra.mxu0 0.0
    %903 = vmatprep.subr.mxu0 0.0
    %904 = vmatpush1.msra.mxu0 0.0
    %905 = vmatprep.subr.mxu0 0.0
    %906 = vmatpush1.msra.mxu0 0.0
    %907 = vmatprep.subr.mxu0 0.0
    %908 = vmatpush1.msra.mxu0 0.0
    %909 = vmatprep.mubr.f32.mxu0 0.0
    %910 = vmatmul.mubr.f32.gmra.mrb[0].mxu0 %v843
    %v911 = vpop.f32.mrb[0].mxu0
    %v912 = vadd.f32 0.0, %v911
    %v913 = vpop.f32.mrb[0].mxu0
    %914 = vdwg.mxu0
    %v916 = vrot.slane %v912, 1
    %v919 = vadd.f32 %v835, %v912
    %v920 = vadd.f32 %v836, %v916
    %v921 = vxor.u32 %v919, 2147483648
    %v922 = vxor.u32 %v920, 2147483648
    %v923 = vmul.f32 %v921, 1.442695
    %v924 = vpow.pop %v923
    %v925 = vmul.f32 %v922, 1.442695
    %v926 = vpow.pop %v925
    %v927 = vadd.f32 %v924, 1.0
    %v928 = vadd.f32 %v926, 1.0
    %v929 = vrcp.pop %v927
    %v930 = vmul.f32 1.0, %v929
    %v931 = vrcp.pop %v928
    %v932 = vmul.f32 1.0, %v931
    %v933 = vmul.f32 %v930, 2.0
    %v934 = vmul.f32 %v932, 2.0
    %v935 = vsub.f32 %v933, 1.0
    %v936 = vsub.f32 %v934, 1.0
    %v937 = vmul.f32 %v930, %v821
    %v938 = vmul.f32 %v932, %v822
    %941 = vrot.lane.b32.xlu0 %v935, 64
    %v942 = vpop.permute.xlu0 %941
    %943 = vrot.lane.b32.xlu0 %v936, 64
    %v944 = vpop.permute.xlu0 %943
    %v947 = vmul.f32 %v930, %v942
    %v948 = vmul.f32 %v932, %v944
    %951 = vrot.lane.b32.xlu0 %v947, 32
    %v952 = vpop.permute.xlu0 %951
    %953 = vrot.lane.b32.xlu0 %v948, 32
    %v954 = vpop.permute.xlu0 %953
    %v957 = vadd.f32 %v937, %v952
    %v958 = vadd.f32 %v938, %v954
    %v959 = vtanh.pop %v957
    %v960 = vtanh.pop %v958
    %963 = vrot.lane.b32.xlu0 %v959, 64
    %v964 = vpop.permute.xlu0 %963
    %965 = vrot.lane.b32.xlu0 %v960, 64
    %v966 = vpop.permute.xlu0 %965
    %v969 = vmul.f32 %v930, %v964
    %v970 = vmul.f32 %v932, %v966
    %v971 = vld [vmem:[%s0 + $0x7] sm:$0x1]
    %v972 = vld [vmem:[%s0 + $0xf] sm:$0x1]
    %v975 = vrot.slane %v970, 7
    %v976 = vsel %vm159, %v975, %v969
    %977 = vrot.lane.b32.xlu0 %v976, 32
    %v978 = vpop.permute.xlu0 %977
    %v979 = vsel %vm24, %v978, 0
    %981 = vmatprep.subr.mxu0 0.0
    %982 = vmatpush1.msra.mxu0 %v18
    %983 = vmatprep.subr.mxu0 0.0
    %984 = vmatpush1.msra.mxu0 %v19
    %985 = vmatprep.subr.mxu0 0.0
    %986 = vmatpush1.msra.mxu0 %v20
    %987 = vmatprep.subr.mxu0 0.0
    %988 = vmatpush1.msra.mxu0 %v21
    %989 = vmatprep.subr.mxu0 0.0
    %990 = vmatpush1.msra.mxu0 0.0
    %991 = vmatprep.subr.mxu0 0.0
    %992 = vmatpush1.msra.mxu0 0.0
    %993 = vmatprep.subr.mxu0 0.0
    %994 = vmatpush1.msra.mxu0 0.0
    %995 = vmatprep.subr.mxu0 0.0
    %996 = vmatpush1.msra.mxu0 0.0
    %997 = vmatprep.subr.mxu0 0.0
    %998 = vmatpush1.msra.mxu0 0.0
    %999 = vmatprep.subr.mxu0 0.0
    %1000 = vmatpush1.msra.mxu0 0.0
    %1001 = vmatprep.subr.mxu0 0.0
    %1002 = vmatpush1.msra.mxu0 0.0
    %1003 = vmatprep.subr.mxu0 0.0
    %1004 = vmatpush1.msra.mxu0 0.0
    %1005 = vmatprep.subr.mxu0 0.0
    %1006 = vmatpush1.msra.mxu0 0.0
    %1007 = vmatprep.subr.mxu0 0.0
    %1008 = vmatpush1.msra.mxu0 0.0
    %1009 = vmatprep.subr.mxu0 0.0
    %1010 = vmatpush1.msra.mxu0 0.0
    %1011 = vmatprep.subr.mxu0 0.0
    %1012 = vmatpush1.msra.mxu0 0.0
    %1013 = vmatprep.subr.mxu0 0.0
    %1014 = vmatpush1.msra.mxu0 0.0
    %1015 = vmatprep.subr.mxu0 0.0
    %1016 = vmatpush1.msra.mxu0 0.0
    %1017 = vmatprep.subr.mxu0 0.0
    %1018 = vmatpush1.msra.mxu0 0.0
    %1019 = vmatprep.subr.mxu0 0.0
    %1020 = vmatpush1.msra.mxu0 0.0
    %1021 = vmatprep.subr.mxu0 0.0
    %1022 = vmatpush1.msra.mxu0 0.0
    %1023 = vmatprep.subr.mxu0 0.0
    %1024 = vmatpush1.msra.mxu0 0.0
    %1025 = vmatprep.subr.mxu0 0.0
    %1026 = vmatpush1.msra.mxu0 0.0
    %1027 = vmatprep.subr.mxu0 0.0
    %1028 = vmatpush1.msra.mxu0 0.0
    %1029 = vmatprep.subr.mxu0 0.0
    %1030 = vmatpush1.msra.mxu0 0.0
    %1031 = vmatprep.subr.mxu0 0.0
    %1032 = vmatpush1.msra.mxu0 0.0
    %1033 = vmatprep.subr.mxu0 0.0
    %1034 = vmatpush1.msra.mxu0 0.0
    %1035 = vmatprep.subr.mxu0 0.0
    %1036 = vmatpush1.msra.mxu0 0.0
    %1037 = vmatprep.subr.mxu0 0.0
    %1038 = vmatpush1.msra.mxu0 0.0
    %1039 = vmatprep.subr.mxu0 0.0
    %1040 = vmatpush1.msra.mxu0 0.0
    %1041 = vmatprep.subr.mxu0 0.0
    %1042 = vmatpush1.msra.mxu0 0.0
    %1043 = vmatprep.subr.mxu0 0.0
    %1044 = vmatpush1.msra.mxu0 0.0
    %1045 = vmatprep.mubr.f32.mxu0 0.0
    %1046 = vmatmul.mubr.f32.gmra.mrb[0].mxu0 %v979
    %v1047 = vpop.f32.mrb[0].mxu0
    %v1048 = vadd.f32 0.0, %v1047
    %v1049 = vpop.f32.mrb[0].mxu0
    %1050 = vdwg.mxu0
    %v1052 = vrot.slane %v1048, 1
    %v1055 = vadd.f32 %v971, %v1048
    %v1056 = vadd.f32 %v972, %v1052
    %v1057 = vxor.u32 %v1055, 2147483648
    %v1058 = vxor.u32 %v1056, 2147483648
    %v1059 = vmul.f32 %v1057, 1.442695
    %v1060 = vpow.pop %v1059
    %v1061 = vmul.f32 %v1058, 1.442695
    %v1062 = vpow.pop %v1061
    %v1063 = vadd.f32 %v1060, 1.0
    %v1064 = vadd.f32 %v1062, 1.0
    %v1065 = vrcp.pop %v1063
    %v1066 = vmul.f32 1.0, %v1065
    %v1067 = vrcp.pop %v1064
    %v1068 = vmul.f32 1.0, %v1067
    %v1069 = vmul.f32 %v1066, 2.0
    %v1070 = vmul.f32 %v1068, 2.0
    %v1071 = vsub.f32 %v1069, 1.0
    %v1072 = vsub.f32 %v1070, 1.0
    %v1073 = vmul.f32 %v1066, %v957
    %v1074 = vmul.f32 %v1068, %v958
    %1077 = vrot.lane.b32.xlu0 %v1071, 64
    %v1078 = vpop.permute.xlu0 %1077
    %1079 = vrot.lane.b32.xlu0 %v1072, 64
    %v1080 = vpop.permute.xlu0 %1079
    %v1083 = vmul.f32 %v1066, %v1078
    %v1084 = vmul.f32 %v1068, %v1080
    %1087 = vrot.lane.b32.xlu0 %v1083, 32
    %v1088 = vpop.permute.xlu0 %1087
    %1089 = vrot.lane.b32.xlu0 %v1084, 32
    %v1090 = vpop.permute.xlu0 %1089
    %v1093 = vadd.f32 %v1073, %v1088
    %v1094 = vadd.f32 %v1074, %v1090
    %v1095 = vtanh.pop %v1093
    %v1096 = vtanh.pop %v1094
    %1099 = vrot.lane.b32.xlu0 %v1095, 64
    %v1100 = vpop.permute.xlu0 %1099
    %1101 = vrot.lane.b32.xlu0 %v1096, 64
    %v1102 = vpop.permute.xlu0 %1101
    %v1105 = vmul.f32 %v1066, %v1100
    %v1106 = vmul.f32 %v1068, %v1102
    %v1107 = vld [vmem:[%s2] sm:$0xff]
    %v1108 = vld [vmem:[%s2 + $0x8] sm:$0xff]
    %v1109 = vld [vmem:[%s2 + $0x10] sm:$0xff]
    %v1110 = vld [vmem:[%s2 + $0x18] sm:$0xff]
    %v1111 = vld [vmem:[%s3] sm:$0x1]
    %v1113 = vlaneseq
    %v1114 = vshrl.u32 %v1113, 7
    %v1115 = vsub.s32 0, %v1114
    %v1116 = vrot.slane %v1111, %v1115
    %v1120 = vrot.slane %v1106, 7
    %v1121 = vsel %vm159, %v1120, %v1105
    %1122 = vrot.lane.b32.xlu0 %v1121, 32
    %v1123 = vpop.permute.xlu0 %1122
    %v1124 = vsel %vm24, %v1123, 0
    %1126 = vmatprep.subr.mxu0 0.0
    %1127 = vmatpush1.msra.mxu0 %v1107
    %1128 = vmatprep.subr.mxu0 0.0
    %1129 = vmatpush1.msra.mxu0 %v1108
    %1130 = vmatprep.subr.mxu0 0.0
    %1131 = vmatpush1.msra.mxu0 %v1109
    %1132 = vmatprep.subr.mxu0 0.0
    %1133 = vmatpush1.msra.mxu0 %v1110
    %1134 = vmatprep.subr.mxu0 0.0
    %1135 = vmatpush1.msra.mxu0 0.0
    %1136 = vmatprep.subr.mxu0 0.0
    %1137 = vmatpush1.msra.mxu0 0.0
    %1138 = vmatprep.subr.mxu0 0.0
    %1139 = vmatpush1.msra.mxu0 0.0
    %1140 = vmatprep.subr.mxu0 0.0
    %1141 = vmatpush1.msra.mxu0 0.0
    %1142 = vmatprep.subr.mxu0 0.0
    %1143 = vmatpush1.msra.mxu0 0.0
    %1144 = vmatprep.subr.mxu0 0.0
    %1145 = vmatpush1.msra.mxu0 0.0
    %1146 = vmatprep.subr.mxu0 0.0
    %1147 = vmatpush1.msra.mxu0 0.0
    %1148 = vmatprep.subr.mxu0 0.0
    %1149 = vmatpush1.msra.mxu0 0.0
    %1150 = vmatprep.subr.mxu0 0.0
    %1151 = vmatpush1.msra.mxu0 0.0
    %1152 = vmatprep.subr.mxu0 0.0
    %1153 = vmatpush1.msra.mxu0 0.0
    %1154 = vmatprep.subr.mxu0 0.0
    %1155 = vmatpush1.msra.mxu0 0.0
    %1156 = vmatprep.subr.mxu0 0.0
    %1157 = vmatpush1.msra.mxu0 0.0
    %1158 = vmatprep.subr.mxu0 0.0
    %1159 = vmatpush1.msra.mxu0 0.0
    %1160 = vmatprep.subr.mxu0 0.0
    %1161 = vmatpush1.msra.mxu0 0.0
    %1162 = vmatprep.subr.mxu0 0.0
    %1163 = vmatpush1.msra.mxu0 0.0
    %1164 = vmatprep.subr.mxu0 0.0
    %1165 = vmatpush1.msra.mxu0 0.0
    %1166 = vmatprep.subr.mxu0 0.0
    %1167 = vmatpush1.msra.mxu0 0.0
    %1168 = vmatprep.subr.mxu0 0.0
    %1169 = vmatpush1.msra.mxu0 0.0
    %1170 = vmatprep.subr.mxu0 0.0
    %1171 = vmatpush1.msra.mxu0 0.0
    %1172 = vmatprep.subr.mxu0 0.0
    %1173 = vmatpush1.msra.mxu0 0.0
    %1174 = vmatprep.subr.mxu0 0.0
    %1175 = vmatpush1.msra.mxu0 0.0
    %1176 = vmatprep.subr.mxu0 0.0
    %1177 = vmatpush1.msra.mxu0 0.0
    %1178 = vmatprep.subr.mxu0 0.0
    %1179 = vmatpush1.msra.mxu0 0.0
    %1180 = vmatprep.subr.mxu0 0.0
    %1181 = vmatpush1.msra.mxu0 0.0
    %1182 = vmatprep.subr.mxu0 0.0
    %1183 = vmatpush1.msra.mxu0 0.0
    %1184 = vmatprep.subr.mxu0 0.0
    %1185 = vmatpush1.msra.mxu0 0.0
    %1186 = vmatprep.subr.mxu0 0.0
    %1187 = vmatpush1.msra.mxu0 0.0
    %1188 = vmatprep.subr.mxu0 0.0
    %1189 = vmatpush1.msra.mxu0 0.0
    %1190 = vmatprep.mubr.f32.mxu0 0.0
    %1191 = vmatmul.mubr.f32.gmra.mrb[0].mxu0 %v1124
    %v1192 = vpop.f32.mrb[0].mxu0
    %v1193 = vadd.f32 %v1116, %v1192
    %v1194 = vpop.f32.mrb[0].mxu0
    %1195 = vdwg.mxu0
    %1196 = vst [vmem:[#allocation2] sm:$0x3] %v1193
    // Predicated region
    $region18: #{modelo_ind_forward.1} parent=1 // pred_check
      _
    $region19: #{modelo_ind_forward.1} parent=1 // pred_check_branch
      %1198 = sbr.rel (0) target = $region21
    $region20: #{modelo_ind_forward.1} parent=1 // pred_region
      %s1200 = ssub.s32 32, 32
      %1201 = vsyncadd [#allocation3], %s1200
      %s1203 = sshll.u32 [#allocation2], 4
      %s1204 = int_to_ptr.vmem [resolvable:$true] %s1203
      %1206 = dma.vmem_to_hbm [thread:$0]  %s1204, 32, %s4, [#allocation3]
    $region21: #{modelo_ind_forward.1} parent=1 // pred_fallthru
      _
    // Predicated region
    $region22: #{modelo_ind_forward.1} parent=1 // pred_check
      _
    $region23: #{modelo_ind_forward.1} parent=1 // pred_check_branch
      %1208 = sbr.rel (0) target = $region25
    $region24: #{modelo_ind_forward.1} parent=1 // pred_region
      %1209 = dma.done [#allocation3], 32
    $region25: #{modelo_ind_forward.1} parent=1 // pred_fallthru
      _
    %1210 = vsyncpa [#allocation3], 1

</llo_original>
